<compile_context>
chip_gen: v7x
topology: tpu7x:2x2x1
jax: 0.10.0
libtpu: 0.0.40
codegen_flags: <defaults>
</compile_context>

<pallas_src>
import functools
import inspect

import jax
import jax.numpy as jnp
from jax.experimental import pallas as pl
from jax.experimental.pallas import tpu as pltpu

# Real Llama3 sizes are DIM=4096, FFN_DIM=14336; use small, shape-compatible
# sizes for this self-contained test (kernel is size-generic).
DIM = 256
FFN_DIM = 512


def _round_up(x, n):
    return ((x + n - 1) // n) * n


try:
    _HAS_PIPELINE_MODE = (
        "pipeline_mode" in inspect.signature(pl.BlockSpec).parameters
        and hasattr(pl, "Buffered")
    )
except (ValueError, TypeError):
    _HAS_PIPELINE_MODE = False


def _block_spec(shape, index_map, bufs=2):
    """BlockSpec with optional non-default pipeline depth (if supported)."""
    if bufs != 2 and _HAS_PIPELINE_MODE:
        return pl.BlockSpec(shape, index_map, pipeline_mode=pl.Buffered(bufs))
    return pl.BlockSpec(shape, index_map)


def _tpu_generation():
    """Returns (gen, vmem_capacity_bytes); gen in {'v5e','v6e','v7x','other'}."""
    gen = "other"
    try:
        kind = jax.devices()[0].device_kind.lower()
        if "v5" in kind:
            gen = "v5e"
        elif "v6" in kind:
            gen = "v6e"
        elif "v7" in kind:
            gen = "v7x"
    except Exception:
        pass
    vmem_cap = {"v5e": 128 << 20, "v6e": 128 << 20, "v7x": 64 << 20}.get(gen, 64 << 20)
    try:
        vmem_cap = int(pltpu.get_tpu_info().vmem_capacity_bytes)
    except Exception:
        pass
    return gen, vmem_cap


def _make_ffn_kernel(use_scratch):
    def kernel(x_ref, w1_ref, w3_ref, w2_ref, o_ref, *scratch):
        acc_ref = scratch[0] if use_scratch else o_ref
        j = pl.program_id(1)

        @pl.when(j == 0)
        def _():
            acc_ref[...] = jnp.zeros_like(acc_ref)

        x = x_ref[...]                                              # (TM, D) bf16
        h1 = jnp.dot(x, w1_ref[...], preferred_element_type=jnp.float32)
        h3 = jnp.dot(x, w3_ref[...], preferred_element_type=jnp.float32)
        h = jax.nn.silu(h1) * h3                                    # SwiGLU, f32
        acc_ref[...] += jnp.dot(h.astype(w2_ref.dtype), w2_ref[...],
                                preferred_element_type=jnp.float32)  # (TM, D) f32

        if use_scratch:
            @pl.when(j == pl.num_programs(1) - 1)
            def _():
                o_ref[...] = acc_ref[...].astype(o_ref.dtype)

    return kernel


@functools.partial(jax.jit, static_argnames=("tm", "tf"))
def feed_forward(x, w1_t, w3_t, w2_t, *, tm=None, tf=None):
    """x: (..., DIM); w1_t/w3_t: (DIM, FFN_DIM); w2_t: (FFN_DIM, DIM).

    For best end-to-end perf store the weights in bf16 (the casts below are
    then no-ops and nothing is repacked per call).
    """
    orig_shape = x.shape
    out_dtype = x.dtype
    d = x.shape[-1]
    ffn = w1_t.shape[1]
    assert w1_t.shape == (d, ffn) and w3_t.shape == (d, ffn)
    assert w2_t.shape == (ffn, d)
    assert d % 128 == 0 and ffn % 128 == 0

    gen, vmem_cap = _tpu_generation()

    x2 = x.reshape(-1, d).astype(jnp.bfloat16)
    m = x2.shape[0]

    # Weights stay in their natural layout; bf16 cast is a no-op if the caller
    # already stores bf16 (recommended).  No per-call interleave/repack.
    w1b = w1_t.astype(jnp.bfloat16)
    w3b = w3_t.astype(jnp.bfloat16)
    w2b = w2_t.astype(jnp.bfloat16)

    # ---- generation-dependent tiling ----------------------------------------
    # Weight-stream arithmetic intensity of this grid == TM flop/byte, so TM
    # sits above the chip's roofline crossover: ~240 (v5e), ~650 (v6e),
    # ~620/TC (v7x).
    if tm is None:
        tm = {"v5e": 256, "v6e": 512, "v7x": 512}.get(gen, 256)
    if tf is None:
        tf = {"v5e": 1024, "v6e": 1024, "v7x": 512}.get(gen, 512)
    while ffn % tf:
        tf //= 2
    tf = max(tf, 128)
    assert ffn % tf == 0

    m16 = _round_up(m, 16)            # bf16 sublane tiling: TM multiple of 16
    tm = min(tm, m16)
    # v7x only: split M across the two TensorCores, but never below 256 rows.
    # (On single-TC v5e/v6e splitting M only re-streams the weights twice.)
    if gen == "v7x" and m16 // tm < 2:
        half = _round_up(m16 // 2, 16)
        if half >= 256:
            tm = half

    nf = ffn // tf
    n_m_tiles = -(-m // tm)
    out_bytes = jnp.dtype(out_dtype).itemsize
    use_scratch = jnp.dtype(out_dtype) != jnp.dtype(jnp.float32)

    # Buffer depths: x only changes with i -> single-buffer on VMEM-tight v7x;
    # deeper weight pipeline on v6e in the weight-BW-bound single-M-tile regime.
    x_bufs = 1 if gen == "v7x" else 2
    w_bufs = 3 if (gen == "v6e" and n_m_tiles == 1 and nf >= 3) else 2

    def _vmem_needed(tm_, tf_, xb, wb):
        return (xb * tm_ * d * 2                 # x tile (bf16)
                + 2 * wb * d * tf_ * 2           # w1 + w3 slabs (bf16)
                + wb * tf_ * d * 2               # w2 slab (bf16)
                + 2 * tm_ * d * out_bytes        # output tile
                + (tm_ * d * 4 if use_scratch else 0)
                + 3 * tm_ * tf_ * 4)             # h1/h3/h intermediates (f32)

    budget = vmem_cap - (16 << 20)               # compiler internal scratch
    if _vmem_needed(tm, tf, x_bufs, w_bufs) > budget:
        w_bufs = 2
    while (_vmem_needed(tm, tf, x_bufs, w_bufs) > budget
           and tf > 256 and ffn % (tf // 2) == 0):
        tf //= 2
    while _vmem_needed(tm, tf, x_bufs, w_bufs) > budget and tm > 256:
        tm = max(256, tm // 2)
    nf = ffn // tf

    m_pad = _round_up(m, tm)
    if m_pad > m:
        x2 = jnp.pad(x2, ((0, m_pad - m), (0, 0)))
    n_m_tiles = m_pad // tm
    grid = (n_m_tiles, nf)

    scratch_shapes = [pltpu.VMEM((tm, d), jnp.float32)] if use_scratch else []

    vmem_needed = _vmem_needed(tm, tf, x_bufs, w_bufs)
    vmem_limit = int(min(max(vmem_needed + (24 << 20), 48 << 20), vmem_cap))

    # Advisory cost estimate so XLA can overlap neighbours (RMSNorm, residual).
    cost = pl.CostEstimate(
        flops=6 * m_pad * ffn * d,
        transcendentals=m_pad * ffn,
        bytes_accessed=(m_pad * d * 2                       # x read (bf16)
                        + n_m_tiles * 3 * d * ffn * 2       # weights per M-tile
                        + m_pad * d * out_bytes),           # output write
    )

    out = pl.pallas_call(
        _make_ffn_kernel(use_scratch),
        out_shape=jax.ShapeDtypeStruct((m_pad, d), out_dtype),
        grid_spec=pltpu.PrefetchScalarGridSpec(
            num_scalar_prefetch=0,
            grid=grid,
            in_specs=[
                _block_spec((tm, d), lambda i, j: (i, 0), x_bufs),   # x tile
                _block_spec((d, tf), lambda i, j: (0, j), w_bufs),   # w1 slab
                _block_spec((d, tf), lambda i, j: (0, j), w_bufs),   # w3 slab
                _block_spec((tf, d), lambda i, j: (j, 0), w_bufs),   # w2 slab
            ],
            out_specs=pl.BlockSpec((tm, d), lambda i, j: (i, 0)),
            scratch_shapes=scratch_shapes,
        ),
        compiler_params=pltpu.CompilerParams(
            dimension_semantics=("parallel", "arbitrary"),
            vmem_limit_bytes=vmem_limit,
        ),
        cost_estimate=cost,
    )(x2, w1b, w3b, w2b)

    return out[:m].reshape(orig_shape)
    # TODO(synk): on v7x, fp8 (e4m3) weights with per-output-channel scales fed
    # straight to the MXU would halve weight HBM traffic (the binding resource
    # for decode/small-M); kept bf16 here for portability across v5e/v6e/v7x.


if __name__ == "__main__":
    key = jax.random.PRNGKey(0)
    kx, k1, k2, k3 = jax.random.split(key, 4)

    batch, seq = 2, 8
    x = jax.random.normal(kx, (batch, seq, DIM), dtype=jnp.float32)

    # Deterministic "parameters" (PyTorch weight (out, in) -> stored transposed).
    scale_in = 1.0 / jnp.sqrt(jnp.float32(DIM))
    scale_ffn = 1.0 / jnp.sqrt(jnp.float32(FFN_DIM))
    w1_t = jax.random.normal(k1, (DIM, FFN_DIM), dtype=jnp.float32) * scale_in
    w3_t = jax.random.normal(k3, (DIM, FFN_DIM), dtype=jnp.float32) * scale_in
    w2_t = jax.random.normal(k2, (FFN_DIM, DIM), dtype=jnp.float32) * scale_ffn

    # Pre-cast weights once (load-time packing): the in-kernel astype is a no-op.
    w1b = w1_t.astype(jnp.bfloat16)
    w3b = w3_t.astype(jnp.bfloat16)
    w2b = w2_t.astype(jnp.bfloat16)

    y = feed_forward(x, w1b, w3b, w2b)
    y = jax.block_until_ready(y)
    assert y.shape == x.shape
    assert y.dtype == x.dtype

    # Reference with matching bf16 matmul inputs / f32 accumulation.
    xb = x.astype(jnp.bfloat16)
    h1 = jnp.dot(xb, w1b, preferred_element_type=jnp.float32)
    h3 = jnp.dot(xb, w3b, preferred_element_type=jnp.float32)
    h = (jax.nn.silu(h1) * h3).astype(jnp.bfloat16)
    ref = jnp.dot(h, w2b, preferred_element_type=jnp.float32)
    assert jnp.allclose(y, ref, atol=2e-2, rtol=2e-2), float(jnp.max(jnp.abs(y - ref)))

    print("KERNEL_OK")
</pallas_src>

<mosaic_0001>
module attributes {stable_mosaic.version = 11 : i64} {
  func.func @kernel(%arg0: i32, %arg1: i32, %arg2: memref<16x256xbf16, #tpu.memory_space<vmem>>, %arg3: memref<256x512xbf16, #tpu.memory_space<vmem>>, %arg4: memref<256x512xbf16, #tpu.memory_space<vmem>>, %arg5: memref<512x256xbf16, #tpu.memory_space<vmem>>, %arg6: memref<16x256xf32, #tpu.memory_space<vmem>>) attributes {dimension_semantics = [#tpu.dimension_semantics<parallel>, #tpu.dimension_semantics<arbitrary>], iteration_bounds = array<i64: 1, 1>, scalar_prefetch = 0 : i64, scratch_operands = 0 : i64, tpu.core_type = #tpu.core_type<tc>, window_params = [{transform_indices = @transform_0, window_bounds = array<i64: 16, 256>}, {transform_indices = @transform_1, window_bounds = array<i64: 256, 512>}, {transform_indices = @transform_2, window_bounds = array<i64: 256, 512>}, {transform_indices = @transform_3, window_bounds = array<i64: 512, 256>}, {transform_indices = @transform_4, window_bounds = array<i64: 16, 256>}]} {
    %c0_i32 = arith.constant 0 : i32
    %0 = arith.cmpi eq, %arg1, %c0_i32 : i32
    %1 = arith.extui %0 : i1 to i32
    %c0_i32_0 = arith.constant 0 : i32
    %2 = arith.cmpi ne, %1, %c0_i32_0 : i32
    scf.if %2 {
      %cst_15 = arith.constant 0.000000e+00 : f32
      %21 = vector.broadcast %cst_15 : f32 to vector<16x256xf32>
      %c0_16 = arith.constant 0 : index
      %c0_17 = arith.constant 0 : index
      %22 = vector.load %arg6[%c0_16, %c0_17] : memref<16x256xf32, #tpu.memory_space<vmem>>, vector<16x256xf32>
      tpu.vector_store %arg6[%c0_16, %c0_17], %21 {strides = array<i32>} : memref<16x256xf32, #tpu.memory_space<vmem>>, vector<16x256xf32>,
    } else {
    }
    %c0 = arith.constant 0 : index
    %c0_1 = arith.constant 0 : index
    %3 = vector.load %arg2[%c0, %c0_1] : memref<16x256xbf16, #tpu.memory_space<vmem>>, vector<16x256xbf16>
    %c0_2 = arith.constant 0 : index
    %c0_3 = arith.constant 0 : index
    %4 = vector.load %arg3[%c0_2, %c0_3] : memref<256x512xbf16, #tpu.memory_space<vmem>>, vector<256x512xbf16>
    %cst = arith.constant dense<0.000000e+00> : vector<16x512xf32>
    %5 = tpu.matmul %3, %4, %cst {dimension_numbers = #tpu.dot_dimension_numbers<[1], [0], [0], [1], [0, 0, 1, 1], [], []>} : vector<16x256xbf16>, vector<256x512xbf16>, vector<16x512xf32> -> vector<16x512xf32>
    %c0_4 = arith.constant 0 : index
    %c0_5 = arith.constant 0 : index
    %6 = vector.load %arg4[%c0_4, %c0_5] : memref<256x512xbf16, #tpu.memory_space<vmem>>, vector<256x512xbf16>
    %cst_6 = arith.constant dense<0.000000e+00> : vector<16x512xf32>
    %7 = tpu.matmul %3, %6, %cst_6 {dimension_numbers = #tpu.dot_dimension_numbers<[1], [0], [0], [1], [0, 0, 1, 1], [], []>} : vector<16x256xbf16>, vector<256x512xbf16>, vector<16x512xf32> -> vector<16x512xf32>
    %8 = arith.negf %5 : vector<16x512xf32>
    %9 = math.exp %8 : vector<16x512xf32>
    %cst_7 = arith.constant 1.000000e+00 : f32
    %10 = vector.broadcast %cst_7 : f32 to vector<16x512xf32>
    %11 = arith.addf %10, %9 : vector<16x512xf32>
    %12 = arith.divf %10, %11 : vector<16x512xf32>
    %13 = arith.mulf %5, %12 : vector<16x512xf32>
    %14 = arith.mulf %13, %7 : vector<16x512xf32>
    %c0_8 = arith.constant 0 : index
    %c0_9 = arith.constant 0 : index
    %15 = vector.load %arg6[%c0_8, %c0_9] : memref<16x256xf32, #tpu.memory_space<vmem>>, vector<16x256xf32>
    %16 = arith.truncf %14 : vector<16x512xf32> to vector<16x512xbf16>
    %c0_10 = arith.constant 0 : index
    %c0_11 = arith.constant 0 : index
    %17 = vector.load %arg5[%c0_10, %c0_11] : memref<512x256xbf16, #tpu.memory_space<vmem>>, vector<512x256xbf16>
    %cst_12 = arith.constant dense<0.000000e+00> : vector<16x256xf32>
    %18 = tpu.matmul %16, %17, %cst_12 {dimension_numbers = #tpu.dot_dimension_numbers<[1], [0], [0], [1], [0, 0, 1, 1], [], []>} : vector<16x512xbf16>, vector<512x256xbf16>, vector<16x256xf32> -> vector<16x256xf32>
    %19 = arith.addf %15, %18 : vector<16x256xf32>
    %c0_13 = arith.constant 0 : index
    %c0_14 = arith.constant 0 : index
    %20 = vector.load %arg6[%c0_13, %c0_14] : memref<16x256xf32, #tpu.memory_space<vmem>>, vector<16x256xf32>
    tpu.vector_store %arg6[%c0_13, %c0_14], %19 {strides = array<i32>} : memref<16x256xf32, #tpu.memory_space<vmem>>, vector<16x256xf32>,
    return
  }
  func.func @transform_0(%arg0: i32, %arg1: i32) -> (i32, i32) {
    %c0_i32 = arith.constant 0 : i32
    %c0_i32_0 = arith.constant 0 : i32
    return %arg0, %c0_i32 : i32, i32
  }
  func.func @transform_1(%arg0: i32, %arg1: i32) -> (i32, i32) {
    %c0_i32 = arith.constant 0 : i32
    %c0_i32_0 = arith.constant 0 : i32
    return %c0_i32, %arg1 : i32, i32
  }
  func.func @transform_2(%arg0: i32, %arg1: i32) -> (i32, i32) {
    %c0_i32 = arith.constant 0 : i32
    %c0_i32_0 = arith.constant 0 : i32
    return %c0_i32, %arg1 : i32, i32
  }
  func.func @transform_3(%arg0: i32, %arg1: i32) -> (i32, i32) {
    %c0_i32 = arith.constant 0 : i32
    %c0_i32_0 = arith.constant 0 : i32
    return %arg1, %c0_i32 : i32, i32
  }
  func.func @transform_4(%arg0: i32, %arg1: i32) -> (i32, i32) {
    %c0_i32 = arith.constant 0 : i32
    %c0_i32_0 = arith.constant 0 : i32
    return %arg0, %c0_i32 : i32, i32
  }
}

</mosaic_0001>

<llo_original>
// kernel: feed_forward.1
$region0: #{feed_forward.1}
  #allocation0 [shape = 'u32[]', space=smem, size = 0x4, offset = 0x4, fixed_abs, tag = 'smem constant byte address 0x4 - core index']
  #allocation1 [shape = 'u32[144,128]{1,0:T(1,128)}', space=vmem, size = 0x12000, scoped, tag = 'internal scratch']
  %s0 = inlined_call_operand.vmem [shape: bf16[16,256], index: 0, kind: input, shape index: {}]
  %s1 = inlined_call_operand.hbm [shape: bf16[256,512], index: 1, kind: input, shape index: {}]
  %s2 = inlined_call_operand.hbm [shape: bf16[256,512], index: 2, kind: input, shape index: {}]
  %s3 = inlined_call_operand.hbm [shape: bf16[512,256], index: 3, kind: input, shape index: {}]
  %s4 = inlined_call_operand.hbm [shape: f32[16,256], index: 4, kind: output, shape index: {}]
  %s5 = sld [smem:[#allocation0]]
  $region42: #{feed_forward.1} parent=0
    _
  %s7 = ssub.s32 1, %s5
  %s8 = scalar_select 0, %s7, %s5
  $region1: #{feed_forward.1} parent=0
    #allocation2 [shape = 'u8[262144]{0}', space=vmem, size = 0x40000, scoped, tag = 'input window, operand 1, single buffered']
    #allocation3 [shape = 's32[1]{0}', space=sflag, size = 0x4, scoped, tag = 'scoped memory for feed_forward.1']
    #allocation4 [shape = 's32[1]{0}', space=sflag, size = 0x4, scoped, tag = 'scoped memory for feed_forward.1']
    #allocation5 [shape = 'u8[262144]{0}', space=vmem, size = 0x40000, scoped, tag = 'input window, operand 2, single buffered']
    #allocation6 [shape = 's32[1]{0}', space=sflag, size = 0x4, scoped, tag = 'scoped memory for feed_forward.1']
    #allocation7 [shape = 'u8[262144]{0}', space=vmem, size = 0x40000, scoped, tag = 'input window, operand 3, single buffered']
    #allocation8 [shape = 'u8[16384]{0}', space=vmem, size = 0x4000, scoped, tag = 'output window, operand 0, single buffered']
    %9 = vsyncpa [#allocation3], 0
    %10 = vsyncpa [#allocation6], 0
    %11 = vsyncpa [#allocation4], 0
    // Predicated region
    $region2: #{feed_forward.1} parent=1 // pred_check
      _
    $region3: #{feed_forward.1} parent=1 // pred_check_branch
      %13 = sbr.rel (0) target = $region5
    $region4: #{feed_forward.1} parent=1 // pred_region
      _
    $region5: #{feed_forward.1} parent=1 // pred_fallthru
      _
    // Predicated region
    $region6: #{feed_forward.1} parent=1 // pred_check
      _
    $region7: #{feed_forward.1} parent=1 // pred_check_branch
      %15 = sbr.rel (0) target = $region9
    $region8: #{feed_forward.1} parent=1 // pred_region
      %s17 = ssub.s32 8192, 8192
      %18 = vsyncadd [#allocation3], %s17
      %s19 = sshll.u32 [#allocation2], 4
      %s20 = int_to_ptr.vmem [resolvable:$true] %s19
      %25 = dma.hbm_to_vmem [thread:$0]  %s1, 8192, %s20, [#allocation3], 256, 256, 16
    $region9: #{feed_forward.1} parent=1 // pred_fallthru
      _
    // Predicated region
    $region10: #{feed_forward.1} parent=1 // pred_check
      _
    $region11: #{feed_forward.1} parent=1 // pred_check_branch
      %27 = sbr.rel (0) target = $region13
    $region12: #{feed_forward.1} parent=1 // pred_region
      %s29 = ssub.s32 8192, 8192
      %30 = vsyncadd [#allocation6], %s29
      %s31 = sshll.u32 [#allocation5], 4
      %s32 = int_to_ptr.vmem [resolvable:$true] %s31
      %37 = dma.hbm_to_vmem [thread:$0]  %s2, 8192, %s32, [#allocation6], 256, 256, 16
    $region13: #{feed_forward.1} parent=1 // pred_fallthru
      _
    // Predicated region
    $region14: #{feed_forward.1} parent=1 // pred_check
      _
    $region15: #{feed_forward.1} parent=1 // pred_check_branch
      %39 = sbr.rel (0) target = $region17
    $region16: #{feed_forward.1} parent=1 // pred_region
      %s41 = ssub.s32 8192, 8192
      %42 = vsyncadd [#allocation6], %s41
      %s43 = sshll.u32 [#allocation7], 4
      %s44 = int_to_ptr.vmem [resolvable:$true] %s43
      %49 = dma.hbm_to_vmem [thread:$0]  %s3, 8192, %s44, [#allocation6], 128, 128, 8
    $region17: #{feed_forward.1} parent=1 // pred_fallthru
      _
    // Predicated region
    $region18: #{feed_forward.1} parent=1 // pred_check
      _
    $region19: #{feed_forward.1} parent=1 // pred_check_branch
      %51 = sbr.rel (0) target = $region21
    $region20: #{feed_forward.1} parent=1 // pred_region
      %52 = dma.done [#allocation3], 8192
    $region21: #{feed_forward.1} parent=1 // pred_fallthru
      _
    // Predicated region
    $region22: #{feed_forward.1} parent=1 // pred_check
      _
    $region23: #{feed_forward.1} parent=1 // pred_check_branch
      %54 = sbr.rel (0) target = $region25
    $region24: #{feed_forward.1} parent=1 // pred_region
      %55 = dma.done [#allocation6], 8192
    $region25: #{feed_forward.1} parent=1 // pred_fallthru
      _
    // Predicated region
    $region26: #{feed_forward.1} parent=1 // pred_check
      _
    $region27: #{feed_forward.1} parent=1 // pred_check_branch
      %57 = sbr.rel (0) target = $region29
    $region28: #{feed_forward.1} parent=1 // pred_region
      %58 = dma.done [#allocation6], 8192
    $region29: #{feed_forward.1} parent=1 // pred_fallthru
      _
    %p59 = scmp.eq.s32.totalorder 0, 0
    // Predicated region
    $region30: #{feed_forward.1} parent=1 // pred_check
      %p60 = pneg %p59
    $region31: #{feed_forward.1} parent=1 // pred_check_branch
      %62 = sbr.rel (%p60) target = $region33
    $region32: #{feed_forward.1} parent=1 // pred_region
      %63 = vst [vmem:[#allocation8] sm:$0xff] 0.0
      %64 = vst [vmem:[#allocation8 + $0x8] sm:$0xff] 0.0
      %65 = vst [vmem:[#allocation8 + $0x10] sm:$0xff] 0.0
      %66 = vst [vmem:[#allocation8 + $0x18] sm:$0xff] 0.0
    $region33: #{feed_forward.1} parent=1 // pred_fallthru
      _
    %v67 = vld [vmem:[%s0] sm:$0xff]
    %v68 = vld [vmem:[%s0 + $0x8] sm:$0xff]
    %v69 = vld [vmem:[#allocation2] sm:$0xff]
    %v70 = vld [vmem:[#allocation2 + $0x8] sm:$0xff]
    %v71 = vld [vmem:[#allocation2 + $0x10] sm:$0xff]
    %v72 = vld [vmem:[#allocation2 + $0x18] sm:$0xff]
    %v73 = vld [vmem:[#allocation2 + $0x20] sm:$0xff]
    %v74 = vld [vmem:[#allocation2 + $0x28] sm:$0xff]
    %v75 = vld [vmem:[#allocation2 + $0x30] sm:$0xff]
    %v76 = vld [vmem:[#allocation2 + $0x38] sm:$0xff]
    %v77 = vld [vmem:[#allocation2 + $0x40] sm:$0xff]
    %v78 = vld [vmem:[#allocation2 + $0x48] sm:$0xff]
    %v79 = vld [vmem:[#allocation2 + $0x50] sm:$0xff]
    %v80 = vld [vmem:[#allocation2 + $0x58] sm:$0xff]
    %v81 = vld [vmem:[#allocation2 + $0x60] sm:$0xff]
    %v82 = vld [vmem:[#allocation2 + $0x68] sm:$0xff]
    %v83 = vld [vmem:[#allocation2 + $0x70] sm:$0xff]
    %v84 = vld [vmem:[#allocation2 + $0x78] sm:$0xff]
    %v85 = vld [vmem:[#allocation2 + $0x80] sm:$0xff]
    %v86 = vld [vmem:[#allocation2 + $0x88] sm:$0xff]
    %v87 = vld [vmem:[#allocation2 + $0x90] sm:$0xff]
    %v88 = vld [vmem:[#allocation2 + $0x98] sm:$0xff]
    %v89 = vld [vmem:[#allocation2 + $0xa0] sm:$0xff]
    %v90 = vld [vmem:[#allocation2 + $0xa8] sm:$0xff]
    %v91 = vld [vmem:[#allocation2 + $0xb0] sm:$0xff]
    %v92 = vld [vmem:[#allocation2 + $0xb8] sm:$0xff]
    %v93 = vld [vmem:[#allocation2 + $0xc0] sm:$0xff]
    %v94 = vld [vmem:[#allocation2 + $0xc8] sm:$0xff]
    %v95 = vld [vmem:[#allocation2 + $0xd0] sm:$0xff]
    %v96 = vld [vmem:[#allocation2 + $0xd8] sm:$0xff]
    %v97 = vld [vmem:[#allocation2 + $0xe0] sm:$0xff]
    %v98 = vld [vmem:[#allocation2 + $0xe8] sm:$0xff]
    %v99 = vld [vmem:[#allocation2 + $0xf0] sm:$0xff]
    %v100 = vld [vmem:[#allocation2 + $0xf8] sm:$0xff]
    %v101 = vld [vmem:[#allocation2 + $0x100] sm:$0xff]
    %v102 = vld [vmem:[#allocation2 + $0x108] sm:$0xff]
    %v103 = vld [vmem:[#allocation2 + $0x110] sm:$0xff]
    %v104 = vld [vmem:[#allocation2 + $0x118] sm:$0xff]
    %v105 = vld [vmem:[#allocation2 + $0x120] sm:$0xff]
    %v106 = vld [vmem:[#allocation2 + $0x128] sm:$0xff]
    %v107 = vld [vmem:[#allocation2 + $0x130] sm:$0xff]
    %v108 = vld [vmem:[#allocation2 + $0x138] sm:$0xff]
    %v109 = vld [vmem:[#allocation2 + $0x140] sm:$0xff]
    %v110 = vld [vmem:[#allocation2 + $0x148] sm:$0xff]
    %v111 = vld [vmem:[#allocation2 + $0x150] sm:$0xff]
    %v112 = vld [vmem:[#allocation2 + $0x158] sm:$0xff]
    %v113 = vld [vmem:[#allocation2 + $0x160] sm:$0xff]
    %v114 = vld [vmem:[#allocation2 + $0x168] sm:$0xff]
    %v115 = vld [vmem:[#allocation2 + $0x170] sm:$0xff]
    %v116 = vld [vmem:[#allocation2 + $0x178] sm:$0xff]
    %v117 = vld [vmem:[#allocation2 + $0x180] sm:$0xff]
    %v118 = vld [vmem:[#allocation2 + $0x188] sm:$0xff]
    %v119 = vld [vmem:[#allocation2 + $0x190] sm:$0xff]
    %v120 = vld [vmem:[#allocation2 + $0x198] sm:$0xff]
    %v121 = vld [vmem:[#allocation2 + $0x1a0] sm:$0xff]
    %v122 = vld [vmem:[#allocation2 + $0x1a8] sm:$0xff]
    %v123 = vld [vmem:[#allocation2 + $0x1b0] sm:$0xff]
    %v124 = vld [vmem:[#allocation2 + $0x1b8] sm:$0xff]
    %v125 = vld [vmem:[#allocation2 + $0x1c0] sm:$0xff]
    %v126 = vld [vmem:[#allocation2 + $0x1c8] sm:$0xff]
    %v127 = vld [vmem:[#allocation2 + $0x1d0] sm:$0xff]
    %v128 = vld [vmem:[#allocation2 + $0x1d8] sm:$0xff]
    %v129 = vld [vmem:[#allocation2 + $0x1e0] sm:$0xff]
    %v130 = vld [vmem:[#allocation2 + $0x1e8] sm:$0xff]
    %v131 = vld [vmem:[#allocation2 + $0x1f0] sm:$0xff]
    %v132 = vld [vmem:[#allocation2 + $0x1f8] sm:$0xff]
    %v135 = vunpack.c.l.b16 %v67
    %v136 = vunpack.c.h.b16 %v67
    %v137 = vunpack.c.l.b16 %v68
    %v138 = vunpack.c.h.b16 %v68
    %v139 = vpack.c.b16 %v137, %v135
    %v140 = vpack.c.b16 %v138, %v136
    %v207 = vunpack.c.l.b16 %v69
    %v208 = vunpack.c.h.b16 %v69
    %v209 = vunpack.c.l.b16 %v70
    %v210 = vunpack.c.h.b16 %v70
    %v211 = vunpack.c.l.b16 %v71
    %v212 = vunpack.c.h.b16 %v71
    %v213 = vunpack.c.l.b16 %v72
    %v214 = vunpack.c.h.b16 %v72
    %v215 = vunpack.c.l.b16 %v73
    %v216 = vunpack.c.h.b16 %v73
    %v217 = vunpack.c.l.b16 %v74
    %v218 = vunpack.c.h.b16 %v74
    %v219 = vunpack.c.l.b16 %v75
    %v220 = vunpack.c.h.b16 %v75
    %v221 = vunpack.c.l.b16 %v76
    %v222 = vunpack.c.h.b16 %v76
    %v223 = vunpack.c.l.b16 %v77
    %v224 = vunpack.c.h.b16 %v77
    %v225 = vunpack.c.l.b16 %v78
    %v226 = vunpack.c.h.b16 %v78
    %v227 = vunpack.c.l.b16 %v79
    %v228 = vunpack.c.h.b16 %v79
    %v229 = vunpack.c.l.b16 %v80
    %v230 = vunpack.c.h.b16 %v80
    %v231 = vunpack.c.l.b16 %v81
    %v232 = vunpack.c.h.b16 %v81
    %v233 = vunpack.c.l.b16 %v82
    %v234 = vunpack.c.h.b16 %v82
    %v235 = vunpack.c.l.b16 %v83
    %v236 = vunpack.c.h.b16 %v83
    %v237 = vunpack.c.l.b16 %v84
    %v238 = vunpack.c.h.b16 %v84
    %v239 = vunpack.c.l.b16 %v85
    %v240 = vunpack.c.h.b16 %v85
    %v241 = vunpack.c.l.b16 %v86
    %v242 = vunpack.c.h.b16 %v86
    %v243 = vunpack.c.l.b16 %v87
    %v244 = vunpack.c.h.b16 %v87
    %v245 = vunpack.c.l.b16 %v88
    %v246 = vunpack.c.h.b16 %v88
    %v247 = vunpack.c.l.b16 %v89
    %v248 = vunpack.c.h.b16 %v89
    %v249 = vunpack.c.l.b16 %v90
    %v250 = vunpack.c.h.b16 %v90
    %v251 = vunpack.c.l.b16 %v91
    %v252 = vunpack.c.h.b16 %v91
    %v253 = vunpack.c.l.b16 %v92
    %v254 = vunpack.c.h.b16 %v92
    %v255 = vunpack.c.l.b16 %v93
    %v256 = vunpack.c.h.b16 %v93
    %v257 = vunpack.c.l.b16 %v94
    %v258 = vunpack.c.h.b16 %v94
    %v259 = vunpack.c.l.b16 %v95
    %v260 = vunpack.c.h.b16 %v95
    %v261 = vunpack.c.l.b16 %v96
    %v262 = vunpack.c.h.b16 %v96
    %v263 = vunpack.c.l.b16 %v97
    %v264 = vunpack.c.h.b16 %v97
    %v265 = vunpack.c.l.b16 %v98
    %v266 = vunpack.c.h.b16 %v98
    %v267 = vunpack.c.l.b16 %v99
    %v268 = vunpack.c.h.b16 %v99
    %v269 = vunpack.c.l.b16 %v100
    %v270 = vunpack.c.h.b16 %v100
    %v271 = vunpack.c.l.b16 %v101
    %v272 = vunpack.c.h.b16 %v101
    %v273 = vunpack.c.l.b16 %v102
    %v274 = vunpack.c.h.b16 %v102
    %v275 = vunpack.c.l.b16 %v103
    %v276 = vunpack.c.h.b16 %v103
    %v277 = vunpack.c.l.b16 %v104
    %v278 = vunpack.c.h.b16 %v104
    %v279 = vunpack.c.l.b16 %v105
    %v280 = vunpack.c.h.b16 %v105
    %v281 = vunpack.c.l.b16 %v106
    %v282 = vunpack.c.h.b16 %v106
    %v283 = vunpack.c.l.b16 %v107
    %v284 = vunpack.c.h.b16 %v107
    %v285 = vunpack.c.l.b16 %v108
    %v286 = vunpack.c.h.b16 %v108
    %v287 = vunpack.c.l.b16 %v109
    %v288 = vunpack.c.h.b16 %v109
    %v289 = vunpack.c.l.b16 %v110
    %v290 = vunpack.c.h.b16 %v110
    %v291 = vunpack.c.l.b16 %v111
    %v292 = vunpack.c.h.b16 %v111
    %v293 = vunpack.c.l.b16 %v112
    %v294 = vunpack.c.h.b16 %v112
    %v295 = vunpack.c.l.b16 %v113
    %v296 = vunpack.c.h.b16 %v113
    %v297 = vunpack.c.l.b16 %v114
    %v298 = vunpack.c.h.b16 %v114
    %v299 = vunpack.c.l.b16 %v115
    %v300 = vunpack.c.h.b16 %v115
    %v301 = vunpack.c.l.b16 %v116
    %v302 = vunpack.c.h.b16 %v116
    %v303 = vunpack.c.l.b16 %v117
    %v304 = vunpack.c.h.b16 %v117
    %v305 = vunpack.c.l.b16 %v118
    %v306 = vunpack.c.h.b16 %v118
    %v307 = vunpack.c.l.b16 %v119
    %v308 = vunpack.c.h.b16 %v119
    %v309 = vunpack.c.l.b16 %v120
    %v310 = vunpack.c.h.b16 %v120
    %v311 = vunpack.c.l.b16 %v121
    %v312 = vunpack.c.h.b16 %v121
    %v313 = vunpack.c.l.b16 %v122
    %v314 = vunpack.c.h.b16 %v122
    %v315 = vunpack.c.l.b16 %v123
    %v316 = vunpack.c.h.b16 %v123
    %v317 = vunpack.c.l.b16 %v124
    %v318 = vunpack.c.h.b16 %v124
    %v319 = vunpack.c.l.b16 %v125
    %v320 = vunpack.c.h.b16 %v125
    %v321 = vunpack.c.l.b16 %v126
    %v322 = vunpack.c.h.b16 %v126
    %v323 = vunpack.c.l.b16 %v127
    %v324 = vunpack.c.h.b16 %v127
    %v325 = vunpack.c.l.b16 %v128
    %v326 = vunpack.c.h.b16 %v128
    %v327 = vunpack.c.l.b16 %v129
    %v328 = vunpack.c.h.b16 %v129
    %v329 = vunpack.c.l.b16 %v130
    %v330 = vunpack.c.h.b16 %v130
    %v331 = vunpack.c.l.b16 %v131
    %v332 = vunpack.c.h.b16 %v131
    %v333 = vunpack.c.l.b16 %v132
    %v334 = vunpack.c.h.b16 %v132
    %v335 = vpack.c.b16 %v211, %v207
    %v336 = vpack.c.b16 %v212, %v208
    %v337 = vpack.c.b16 %v213, %v209
    %v338 = vpack.c.b16 %v214, %v210
    %v339 = vpack.c.b16 %v219, %v215
    %v340 = vpack.c.b16 %v220, %v216
    %v341 = vpack.c.b16 %v221, %v217
    %v342 = vpack.c.b16 %v222, %v218
    %v343 = vpack.c.b16 %v227, %v223
    %v344 = vpack.c.b16 %v228, %v224
    %v345 = vpack.c.b16 %v229, %v225
    %v346 = vpack.c.b16 %v230, %v226
    %v347 = vpack.c.b16 %v235, %v231
    %v348 = vpack.c.b16 %v236, %v232
    %v349 = vpack.c.b16 %v237, %v233
    %v350 = vpack.c.b16 %v238, %v234
    %v351 = vpack.c.b16 %v243, %v239
    %v352 = vpack.c.b16 %v244, %v240
    %v353 = vpack.c.b16 %v245, %v241
    %v354 = vpack.c.b16 %v246, %v242
    %v355 = vpack.c.b16 %v251, %v247
    %v356 = vpack.c.b16 %v252, %v248
    %v357 = vpack.c.b16 %v253, %v249
    %v358 = vpack.c.b16 %v254, %v250
    %v359 = vpack.c.b16 %v259, %v255
    %v360 = vpack.c.b16 %v260, %v256
    %v361 = vpack.c.b16 %v261, %v257
    %v362 = vpack.c.b16 %v262, %v258
    %v363 = vpack.c.b16 %v267, %v263
    %v364 = vpack.c.b16 %v268, %v264
    %v365 = vpack.c.b16 %v269, %v265
    %v366 = vpack.c.b16 %v270, %v266
    %v367 = vpack.c.b16 %v275, %v271
    %v368 = vpack.c.b16 %v276, %v272
    %v369 = vpack.c.b16 %v277, %v273
    %v370 = vpack.c.b16 %v278, %v274
    %v371 = vpack.c.b16 %v283, %v279
    %v372 = vpack.c.b16 %v284, %v280
    %v373 = vpack.c.b16 %v285, %v281
    %v374 = vpack.c.b16 %v286, %v282
    %v375 = vpack.c.b16 %v291, %v287
    %v376 = vpack.c.b16 %v292, %v288
    %v377 = vpack.c.b16 %v293, %v289
    %v378 = vpack.c.b16 %v294, %v290
    %v379 = vpack.c.b16 %v299, %v295
    %v380 = vpack.c.b16 %v300, %v296
    %v381 = vpack.c.b16 %v301, %v297
    %v382 = vpack.c.b16 %v302, %v298
    %v383 = vpack.c.b16 %v307, %v303
    %v384 = vpack.c.b16 %v308, %v304
    %v385 = vpack.c.b16 %v309, %v305
    %v386 = vpack.c.b16 %v310, %v306
    %v387 = vpack.c.b16 %v315, %v311
    %v388 = vpack.c.b16 %v316, %v312
    %v389 = vpack.c.b16 %v317, %v313
    %v390 = vpack.c.b16 %v318, %v314
    %v391 = vpack.c.b16 %v323, %v319
    %v392 = vpack.c.b16 %v324, %v320
    %v393 = vpack.c.b16 %v325, %v321
    %v394 = vpack.c.b16 %v326, %v322
    %v395 = vpack.c.b16 %v331, %v327
    %v396 = vpack.c.b16 %v332, %v328
    %v397 = vpack.c.b16 %v333, %v329
    %v398 = vpack.c.b16 %v334, %v330
    %463 = vmatprep.subr.bf16.mxu0 %v336
    %464 = vmatpush1.bf16.msra.mxu0 %v335
    %465 = vmatprep.subr.bf16.mxu0 %v340
    %466 = vmatpush1.bf16.msra.mxu0 %v339
    %467 = vmatprep.subr.bf16.mxu0 %v344
    %468 = vmatpush1.bf16.msra.mxu0 %v343
    %469 = vmatprep.subr.bf16.mxu0 %v348
    %470 = vmatpush1.bf16.msra.mxu0 %v347
    %471 = vmatprep.subr.bf16.mxu0 %v352
    %472 = vmatpush1.bf16.msra.mxu0 %v351
    %473 = vmatprep.subr.bf16.mxu0 %v356
    %474 = vmatpush1.bf16.msra.mxu0 %v355
    %475 = vmatprep.subr.bf16.mxu0 %v360
    %476 = vmatpush1.bf16.msra.mxu0 %v359
    %477 = vmatprep.subr.bf16.mxu0 %v364
    %478 = vmatpush1.bf16.msra.mxu0 %v363
    %479 = vmatprep.subr.bf16.mxu0 %v368
    %480 = vmatpush1.bf16.msra.mxu0 %v367
    %481 = vmatprep.subr.bf16.mxu0 %v372
    %482 = vmatpush1.bf16.msra.mxu0 %v371
    %483 = vmatprep.subr.bf16.mxu0 %v376
    %484 = vmatpush1.bf16.msra.mxu0 %v375
    %485 = vmatprep.subr.bf16.mxu0 %v380
    %486 = vmatpush1.bf16.msra.mxu0 %v379
    %487 = vmatprep.subr.bf16.mxu0 %v384
    %488 = vmatpush1.bf16.msra.mxu0 %v383
    %489 = vmatprep.subr.bf16.mxu0 %v388
    %490 = vmatpush1.bf16.msra.mxu0 %v387
    %491 = vmatprep.subr.bf16.mxu0 %v392
    %492 = vmatpush1.bf16.msra.mxu0 %v391
    %493 = vmatprep.subr.bf16.mxu0 %v396
    %494 = vmatpush1.bf16.msra.mxu0 %v395
    %495 = vmatprep.mubr.bf16.mxu0 %v140
    %496 = vmatmul.mubr.bf16.gmra.mrb[0].mxu0 %v139
    %v497 = vpop.f32.mrb[0].mxu0
    %v498 = vadd.f32 0.0, %v497
    %v499 = vpop.f32.mrb[0].mxu0
    %v500 = vadd.f32 0.0, %v499
    %v501 = vpop.f32.mrb[0].mxu0
    %v502 = vadd.f32 0.0, %v501
    %v503 = vpop.f32.mrb[0].mxu0
    %v504 = vadd.f32 0.0, %v503
    %505 = vdwg.mxu0
    %506 = vmatprep.subr.bf16.mxu0 %v338
    %507 = vmatpush1.bf16.msra.mxu0 %v337
    %508 = vmatprep.subr.bf16.mxu0 %v342
    %509 = vmatpush1.bf16.msra.mxu0 %v341
    %510 = vmatprep.subr.bf16.mxu0 %v346
    %511 = vmatpush1.bf16.msra.mxu0 %v345
    %512 = vmatprep.subr.bf16.mxu0 %v350
    %513 = vmatpush1.bf16.msra.mxu0 %v349
    %514 = vmatprep.subr.bf16.mxu0 %v354
    %515 = vmatpush1.bf16.msra.mxu0 %v353
    %516 = vmatprep.subr.bf16.mxu0 %v358
    %517 = vmatpush1.bf16.msra.mxu0 %v357
    %518 = vmatprep.subr.bf16.mxu0 %v362
    %519 = vmatpush1.bf16.msra.mxu0 %v361
    %520 = vmatprep.subr.bf16.mxu0 %v366
    %521 = vmatpush1.bf16.msra.mxu0 %v365
    %522 = vmatprep.subr.bf16.mxu0 %v370
    %523 = vmatpush1.bf16.msra.mxu0 %v369
    %524 = vmatprep.subr.bf16.mxu0 %v374
    %525 = vmatpush1.bf16.msra.mxu0 %v373
    %526 = vmatprep.subr.bf16.mxu0 %v378
    %527 = vmatpush1.bf16.msra.mxu0 %v377
    %528 = vmatprep.subr.bf16.mxu0 %v382
    %529 = vmatpush1.bf16.msra.mxu0 %v381
    %530 = vmatprep.subr.bf16.mxu0 %v386
    %531 = vmatpush1.bf16.msra.mxu0 %v385
    %532 = vmatprep.subr.bf16.mxu0 %v390
    %533 = vmatpush1.bf16.msra.mxu0 %v389
    %534 = vmatprep.subr.bf16.mxu0 %v394
    %535 = vmatpush1.bf16.msra.mxu0 %v393
    %536 = vmatprep.subr.bf16.mxu0 %v398
    %537 = vmatpush1.bf16.msra.mxu0 %v397
    %538 = vmatprep.mubr.bf16.mxu0 %v140
    %539 = vmatmul.mubr.bf16.gmra.mrb[0].mxu0 %v139
    %v540 = vpop.f32.mrb[0].mxu0
    %v541 = vadd.f32 0.0, %v540
    %v542 = vpop.f32.mrb[0].mxu0
    %v543 = vadd.f32 0.0, %v542
    %v544 = vpop.f32.mrb[0].mxu0
    %v545 = vadd.f32 0.0, %v544
    %v546 = vpop.f32.mrb[0].mxu0
    %v547 = vadd.f32 0.0, %v546
    %548 = vdwg.mxu0
    %v549 = vld [vmem:[#allocation5] sm:$0xff]
    %v550 = vld [vmem:[#allocation5 + $0x8] sm:$0xff]
    %v551 = vld [vmem:[#allocation5 + $0x10] sm:$0xff]
    %v552 = vld [vmem:[#allocation5 + $0x18] sm:$0xff]
    %v553 = vld [vmem:[#allocation5 + $0x20] sm:$0xff]
    %v554 = vld [vmem:[#allocation5 + $0x28] sm:$0xff]
    %v555 = vld [vmem:[#allocation5 + $0x30] sm:$0xff]
    %v556 = vld [vmem:[#allocation5 + $0x38] sm:$0xff]
    %v557 = vld [vmem:[#allocation5 + $0x40] sm:$0xff]
    %v558 = vld [vmem:[#allocation5 + $0x48] sm:$0xff]
    %v559 = vld [vmem:[#allocation5 + $0x50] sm:$0xff]
    %v560 = vld [vmem:[#allocation5 + $0x58] sm:$0xff]
    %v561 = vld [vmem:[#allocation5 + $0x60] sm:$0xff]
    %v562 = vld [vmem:[#allocation5 + $0x68] sm:$0xff]
    %v563 = vld [vmem:[#allocation5 + $0x70] sm:$0xff]
    %v564 = vld [vmem:[#allocation5 + $0x78] sm:$0xff]
    %v565 = vld [vmem:[#allocation5 + $0x80] sm:$0xff]
    %v566 = vld [vmem:[#allocation5 + $0x88] sm:$0xff]
    %v567 = vld [vmem:[#allocation5 + $0x90] sm:$0xff]
    %v568 = vld [vmem:[#allocation5 + $0x98] sm:$0xff]
    %v569 = vld [vmem:[#allocation5 + $0xa0] sm:$0xff]
    %v570 = vld [vmem:[#allocation5 + $0xa8] sm:$0xff]
    %v571 = vld [vmem:[#allocation5 + $0xb0] sm:$0xff]
    %v572 = vld [vmem:[#allocation5 + $0xb8] sm:$0xff]
    %v573 = vld [vmem:[#allocation5 + $0xc0] sm:$0xff]
    %v574 = vld [vmem:[#allocation5 + $0xc8] sm:$0xff]
    %v575 = vld [vmem:[#allocation5 + $0xd0] sm:$0xff]
    %v576 = vld [vmem:[#allocation5 + $0xd8] sm:$0xff]
    %v577 = vld [vmem:[#allocation5 + $0xe0] sm:$0xff]
    %v578 = vld [vmem:[#allocation5 + $0xe8] sm:$0xff]
    %v579 = vld [vmem:[#allocation5 + $0xf0] sm:$0xff]
    %v580 = vld [vmem:[#allocation5 + $0xf8] sm:$0xff]
    %v581 = vld [vmem:[#allocation5 + $0x100] sm:$0xff]
    %v582 = vld [vmem:[#allocation5 + $0x108] sm:$0xff]
    %v583 = vld [vmem:[#allocation5 + $0x110] sm:$0xff]
    %v584 = vld [vmem:[#allocation5 + $0x118] sm:$0xff]
    %v585 = vld [vmem:[#allocation5 + $0x120] sm:$0xff]
    %v586 = vld [vmem:[#allocation5 + $0x128] sm:$0xff]
    %v587 = vld [vmem:[#allocation5 + $0x130] sm:$0xff]
    %v588 = vld [vmem:[#allocation5 + $0x138] sm:$0xff]
    %v589 = vld [vmem:[#allocation5 + $0x140] sm:$0xff]
    %v590 = vld [vmem:[#allocation5 + $0x148] sm:$0xff]
    %v591 = vld [vmem:[#allocation5 + $0x150] sm:$0xff]
    %v592 = vld [vmem:[#allocation5 + $0x158] sm:$0xff]
    %v593 = vld [vmem:[#allocation5 + $0x160] sm:$0xff]
    %v594 = vld [vmem:[#allocation5 + $0x168] sm:$0xff]
    %v595 = vld [vmem:[#allocation5 + $0x170] sm:$0xff]
    %v596 = vld [vmem:[#allocation5 + $0x178] sm:$0xff]
    %v597 = vld [vmem:[#allocation5 + $0x180] sm:$0xff]
    %v598 = vld [vmem:[#allocation5 + $0x188] sm:$0xff]
    %v599 = vld [vmem:[#allocation5 + $0x190] sm:$0xff]
    %v600 = vld [vmem:[#allocation5 + $0x198] sm:$0xff]
    %v601 = vld [vmem:[#allocation5 + $0x1a0] sm:$0xff]
    %v602 = vld [vmem:[#allocation5 + $0x1a8] sm:$0xff]
    %v603 = vld [vmem:[#allocation5 + $0x1b0] sm:$0xff]
    %v604 = vld [vmem:[#allocation5 + $0x1b8] sm:$0xff]
    %v605 = vld [vmem:[#allocation5 + $0x1c0] sm:$0xff]
    %v606 = vld [vmem:[#allocation5 + $0x1c8] sm:$0xff]
    %v607 = vld [vmem:[#allocation5 + $0x1d0] sm:$0xff]
    %v608 = vld [vmem:[#allocation5 + $0x1d8] sm:$0xff]
    %v609 = vld [vmem:[#allocation5 + $0x1e0] sm:$0xff]
    %v610 = vld [vmem:[#allocation5 + $0x1e8] sm:$0xff]
    %v611 = vld [vmem:[#allocation5 + $0x1f0] sm:$0xff]
    %v612 = vld [vmem:[#allocation5 + $0x1f8] sm:$0xff]
    %v677 = vunpack.c.l.b16 %v549
    %v678 = vunpack.c.h.b16 %v549
    %v679 = vunpack.c.l.b16 %v550
    %v680 = vunpack.c.h.b16 %v550
    %v681 = vunpack.c.l.b16 %v551
    %v682 = vunpack.c.h.b16 %v551
    %v683 = vunpack.c.l.b16 %v552
    %v684 = vunpack.c.h.b16 %v552
    %v685 = vunpack.c.l.b16 %v553
    %v686 = vunpack.c.h.b16 %v553
    %v687 = vunpack.c.l.b16 %v554
    %v688 = vunpack.c.h.b16 %v554
    %v689 = vunpack.c.l.b16 %v555
    %v690 = vunpack.c.h.b16 %v555
    %v691 = vunpack.c.l.b16 %v556
    %v692 = vunpack.c.h.b16 %v556
    %v693 = vunpack.c.l.b16 %v557
    %v694 = vunpack.c.h.b16 %v557
    %v695 = vunpack.c.l.b16 %v558
    %v696 = vunpack.c.h.b16 %v558
    %v697 = vunpack.c.l.b16 %v559
    %v698 = vunpack.c.h.b16 %v559
    %v699 = vunpack.c.l.b16 %v560
    %v700 = vunpack.c.h.b16 %v560
    %v701 = vunpack.c.l.b16 %v561
    %v702 = vunpack.c.h.b16 %v561
    %v703 = vunpack.c.l.b16 %v562
    %v704 = vunpack.c.h.b16 %v562
    %v705 = vunpack.c.l.b16 %v563
    %v706 = vunpack.c.h.b16 %v563
    %v707 = vunpack.c.l.b16 %v564
    %v708 = vunpack.c.h.b16 %v564
    %v709 = vunpack.c.l.b16 %v565
    %v710 = vunpack.c.h.b16 %v565
    %v711 = vunpack.c.l.b16 %v566
    %v712 = vunpack.c.h.b16 %v566
    %v713 = vunpack.c.l.b16 %v567
    %v714 = vunpack.c.h.b16 %v567
    %v715 = vunpack.c.l.b16 %v568
    %v716 = vunpack.c.h.b16 %v568
    %v717 = vunpack.c.l.b16 %v569
    %v718 = vunpack.c.h.b16 %v569
    %v719 = vunpack.c.l.b16 %v570
    %v720 = vunpack.c.h.b16 %v570
    %v721 = vunpack.c.l.b16 %v571
    %v722 = vunpack.c.h.b16 %v571
    %v723 = vunpack.c.l.b16 %v572
    %v724 = vunpack.c.h.b16 %v572
    %v725 = vunpack.c.l.b16 %v573
    %v726 = vunpack.c.h.b16 %v573
    %v727 = vunpack.c.l.b16 %v574
    %v728 = vunpack.c.h.b16 %v574
    %v729 = vunpack.c.l.b16 %v575
    %v730 = vunpack.c.h.b16 %v575
    %v731 = vunpack.c.l.b16 %v576
    %v732 = vunpack.c.h.b16 %v576
    %v733 = vunpack.c.l.b16 %v577
    %v734 = vunpack.c.h.b16 %v577
    %v735 = vunpack.c.l.b16 %v578
    %v736 = vunpack.c.h.b16 %v578
    %v737 = vunpack.c.l.b16 %v579
    %v738 = vunpack.c.h.b16 %v579
    %v739 = vunpack.c.l.b16 %v580
    %v740 = vunpack.c.h.b16 %v580
    %v741 = vunpack.c.l.b16 %v581
    %v742 = vunpack.c.h.b16 %v581
    %v743 = vunpack.c.l.b16 %v582
    %v744 = vunpack.c.h.b16 %v582
    %v745 = vunpack.c.l.b16 %v583
    %v746 = vunpack.c.h.b16 %v583
    %v747 = vunpack.c.l.b16 %v584
    %v748 = vunpack.c.h.b16 %v584
    %v749 = vunpack.c.l.b16 %v585
    %v750 = vunpack.c.h.b16 %v585
    %v751 = vunpack.c.l.b16 %v586
    %v752 = vunpack.c.h.b16 %v586
    %v753 = vunpack.c.l.b16 %v587
    %v754 = vunpack.c.h.b16 %v587
    %v755 = vunpack.c.l.b16 %v588
    %v756 = vunpack.c.h.b16 %v588
    %v757 = vunpack.c.l.b16 %v589
    %v758 = vunpack.c.h.b16 %v589
    %v759 = vunpack.c.l.b16 %v590
    %v760 = vunpack.c.h.b16 %v590
    %v761 = vunpack.c.l.b16 %v591
    %v762 = vunpack.c.h.b16 %v591
    %v763 = vunpack.c.l.b16 %v592
    %v764 = vunpack.c.h.b16 %v592
    %v765 = vunpack.c.l.b16 %v593
    %v766 = vunpack.c.h.b16 %v593
    %v767 = vunpack.c.l.b16 %v594
    %v768 = vunpack.c.h.b16 %v594
    %v769 = vunpack.c.l.b16 %v595
    %v770 = vunpack.c.h.b16 %v595
    %v771 = vunpack.c.l.b16 %v596
    %v772 = vunpack.c.h.b16 %v596
    %v773 = vunpack.c.l.b16 %v597
    %v774 = vunpack.c.h.b16 %v597
    %v775 = vunpack.c.l.b16 %v598
    %v776 = vunpack.c.h.b16 %v598
    %v777 = vunpack.c.l.b16 %v599
    %v778 = vunpack.c.h.b16 %v599
    %v779 = vunpack.c.l.b16 %v600
    %v780 = vunpack.c.h.b16 %v600
    %v781 = vunpack.c.l.b16 %v601
    %v782 = vunpack.c.h.b16 %v601
    %v783 = vunpack.c.l.b16 %v602
    %v784 = vunpack.c.h.b16 %v602
    %v785 = vunpack.c.l.b16 %v603
    %v786 = vunpack.c.h.b16 %v603
    %v787 = vunpack.c.l.b16 %v604
    %v788 = vunpack.c.h.b16 %v604
    %v789 = vunpack.c.l.b16 %v605
    %v790 = vunpack.c.h.b16 %v605
    %v791 = vunpack.c.l.b16 %v606
    %v792 = vunpack.c.h.b16 %v606
    %v793 = vunpack.c.l.b16 %v607
    %v794 = vunpack.c.h.b16 %v607
    %v795 = vunpack.c.l.b16 %v608
    %v796 = vunpack.c.h.b16 %v608
    %v797 = vunpack.c.l.b16 %v609
    %v798 = vunpack.c.h.b16 %v609
    %v799 = vunpack.c.l.b16 %v610
    %v800 = vunpack.c.h.b16 %v610
    %v801 = vunpack.c.l.b16 %v611
    %v802 = vunpack.c.h.b16 %v611
    %v803 = vunpack.c.l.b16 %v612
    %v804 = vunpack.c.h.b16 %v612
    %v805 = vpack.c.b16 %v681, %v677
    %v806 = vpack.c.b16 %v682, %v678
    %v807 = vpack.c.b16 %v683, %v679
    %v808 = vpack.c.b16 %v684, %v680
    %v809 = vpack.c.b16 %v689, %v685
    %v810 = vpack.c.b16 %v690, %v686
    %v811 = vpack.c.b16 %v691, %v687
    %v812 = vpack.c.b16 %v692, %v688
    %v813 = vpack.c.b16 %v697, %v693
    %v814 = vpack.c.b16 %v698, %v694
    %v815 = vpack.c.b16 %v699, %v695
    %v816 = vpack.c.b16 %v700, %v696
    %v817 = vpack.c.b16 %v705, %v701
    %v818 = vpack.c.b16 %v706, %v702
    %v819 = vpack.c.b16 %v707, %v703
    %v820 = vpack.c.b16 %v708, %v704
    %v821 = vpack.c.b16 %v713, %v709
    %v822 = vpack.c.b16 %v714, %v710
    %v823 = vpack.c.b16 %v715, %v711
    %v824 = vpack.c.b16 %v716, %v712
    %v825 = vpack.c.b16 %v721, %v717
    %v826 = vpack.c.b16 %v722, %v718
    %v827 = vpack.c.b16 %v723, %v719
    %v828 = vpack.c.b16 %v724, %v720
    %v829 = vpack.c.b16 %v729, %v725
    %v830 = vpack.c.b16 %v730, %v726
    %v831 = vpack.c.b16 %v731, %v727
    %v832 = vpack.c.b16 %v732, %v728
    %v833 = vpack.c.b16 %v737, %v733
    %v834 = vpack.c.b16 %v738, %v734
    %v835 = vpack.c.b16 %v739, %v735
    %v836 = vpack.c.b16 %v740, %v736
    %v837 = vpack.c.b16 %v745, %v741
    %v838 = vpack.c.b16 %v746, %v742
    %v839 = vpack.c.b16 %v747, %v743
    %v840 = vpack.c.b16 %v748, %v744
    %v841 = vpack.c.b16 %v753, %v749
    %v842 = vpack.c.b16 %v754, %v750
    %v843 = vpack.c.b16 %v755, %v751
    %v844 = vpack.c.b16 %v756, %v752
    %v845 = vpack.c.b16 %v761, %v757
    %v846 = vpack.c.b16 %v762, %v758
    %v847 = vpack.c.b16 %v763, %v759
    %v848 = vpack.c.b16 %v764, %v760
    %v849 = vpack.c.b16 %v769, %v765
    %v850 = vpack.c.b16 %v770, %v766
    %v851 = vpack.c.b16 %v771, %v767
    %v852 = vpack.c.b16 %v772, %v768
    %v853 = vpack.c.b16 %v777, %v773
    %v854 = vpack.c.b16 %v778, %v774
    %v855 = vpack.c.b16 %v779, %v775
    %v856 = vpack.c.b16 %v780, %v776
    %v857 = vpack.c.b16 %v785, %v781
    %v858 = vpack.c.b16 %v786, %v782
    %v859 = vpack.c.b16 %v787, %v783
    %v860 = vpack.c.b16 %v788, %v784
    %v861 = vpack.c.b16 %v793, %v789
    %v862 = vpack.c.b16 %v794, %v790
    %v863 = vpack.c.b16 %v795, %v791
    %v864 = vpack.c.b16 %v796, %v792
    %v865 = vpack.c.b16 %v801, %v797
    %v866 = vpack.c.b16 %v802, %v798
    %v867 = vpack.c.b16 %v803, %v799
    %v868 = vpack.c.b16 %v804, %v800
    %933 = vmatprep.subr.bf16.mxu0 %v806
    %934 = vmatpush1.bf16.msra.mxu0 %v805
    %935 = vmatprep.subr.bf16.mxu0 %v810
    %936 = vmatpush1.bf16.msra.mxu0 %v809
    %937 = vmatprep.subr.bf16.mxu0 %v814
    %938 = vmatpush1.bf16.msra.mxu0 %v813
    %939 = vmatprep.subr.bf16.mxu0 %v818
    %940 = vmatpush1.bf16.msra.mxu0 %v817
    %941 = vmatprep.subr.bf16.mxu0 %v822
    %942 = vmatpush1.bf16.msra.mxu0 %v821
    %943 = vmatprep.subr.bf16.mxu0 %v826
    %944 = vmatpush1.bf16.msra.mxu0 %v825
    %945 = vmatprep.subr.bf16.mxu0 %v830
    %946 = vmatpush1.bf16.msra.mxu0 %v829
    %947 = vmatprep.subr.bf16.mxu0 %v834
    %948 = vmatpush1.bf16.msra.mxu0 %v833
    %949 = vmatprep.subr.bf16.mxu0 %v838
    %950 = vmatpush1.bf16.msra.mxu0 %v837
    %951 = vmatprep.subr.bf16.mxu0 %v842
    %952 = vmatpush1.bf16.msra.mxu0 %v841
    %953 = vmatprep.subr.bf16.mxu0 %v846
    %954 = vmatpush1.bf16.msra.mxu0 %v845
    %955 = vmatprep.subr.bf16.mxu0 %v850
    %956 = vmatpush1.bf16.msra.mxu0 %v849
    %957 = vmatprep.subr.bf16.mxu0 %v854
    %958 = vmatpush1.bf16.msra.mxu0 %v853
    %959 = vmatprep.subr.bf16.mxu0 %v858
    %960 = vmatpush1.bf16.msra.mxu0 %v857
    %961 = vmatprep.subr.bf16.mxu0 %v862
    %962 = vmatpush1.bf16.msra.mxu0 %v861
    %963 = vmatprep.subr.bf16.mxu0 %v866
    %964 = vmatpush1.bf16.msra.mxu0 %v865
    %965 = vmatprep.mubr.bf16.mxu0 %v140
    %966 = vmatmul.mubr.bf16.gmra.mrb[0].mxu0 %v139
    %v967 = vpop.f32.mrb[0].mxu0
    %v968 = vadd.f32 0.0, %v967
    %v969 = vpop.f32.mrb[0].mxu0
    %v970 = vadd.f32 0.0, %v969
    %v971 = vpop.f32.mrb[0].mxu0
    %v972 = vadd.f32 0.0, %v971
    %v973 = vpop.f32.mrb[0].mxu0
    %v974 = vadd.f32 0.0, %v973
    %975 = vdwg.mxu0
    %976 = vmatprep.subr.bf16.mxu0 %v808
    %977 = vmatpush1.bf16.msra.mxu0 %v807
    %978 = vmatprep.subr.bf16.mxu0 %v812
    %979 = vmatpush1.bf16.msra.mxu0 %v811
    %980 = vmatprep.subr.bf16.mxu0 %v816
    %981 = vmatpush1.bf16.msra.mxu0 %v815
    %982 = vmatprep.subr.bf16.mxu0 %v820
    %983 = vmatpush1.bf16.msra.mxu0 %v819
    %984 = vmatprep.subr.bf16.mxu0 %v824
    %985 = vmatpush1.bf16.msra.mxu0 %v823
    %986 = vmatprep.subr.bf16.mxu0 %v828
    %987 = vmatpush1.bf16.msra.mxu0 %v827
    %988 = vmatprep.subr.bf16.mxu0 %v832
    %989 = vmatpush1.bf16.msra.mxu0 %v831
    %990 = vmatprep.subr.bf16.mxu0 %v836
    %991 = vmatpush1.bf16.msra.mxu0 %v835
    %992 = vmatprep.subr.bf16.mxu0 %v840
    %993 = vmatpush1.bf16.msra.mxu0 %v839
    %994 = vmatprep.subr.bf16.mxu0 %v844
    %995 = vmatpush1.bf16.msra.mxu0 %v843
    %996 = vmatprep.subr.bf16.mxu0 %v848
    %997 = vmatpush1.bf16.msra.mxu0 %v847
    %998 = vmatprep.subr.bf16.mxu0 %v852
    %999 = vmatpush1.bf16.msra.mxu0 %v851
    %1000 = vmatprep.subr.bf16.mxu0 %v856
    %1001 = vmatpush1.bf16.msra.mxu0 %v855
    %1002 = vmatprep.subr.bf16.mxu0 %v860
    %1003 = vmatpush1.bf16.msra.mxu0 %v859
    %1004 = vmatprep.subr.bf16.mxu0 %v864
    %1005 = vmatpush1.bf16.msra.mxu0 %v863
    %1006 = vmatprep.subr.bf16.mxu0 %v868
    %1007 = vmatpush1.bf16.msra.mxu0 %v867
    %1008 = vmatprep.mubr.bf16.mxu0 %v140
    %1009 = vmatmul.mubr.bf16.gmra.mrb[0].mxu0 %v139
    %v1010 = vpop.f32.mrb[0].mxu0
    %v1011 = vadd.f32 0.0, %v1010
    %v1012 = vpop.f32.mrb[0].mxu0
    %v1013 = vadd.f32 0.0, %v1012
    %v1014 = vpop.f32.mrb[0].mxu0
    %v1015 = vadd.f32 0.0, %v1014
    %v1016 = vpop.f32.mrb[0].mxu0
    %v1017 = vadd.f32 0.0, %v1016
    %1018 = vdwg.mxu0
    %v1019 = vxor.u32 %v498, 2147483648
    %v1020 = vxor.u32 %v500, 2147483648
    %v1021 = vxor.u32 %v541, 2147483648
    %v1022 = vxor.u32 %v543, 2147483648
    %v1023 = vxor.u32 %v502, 2147483648
    %v1024 = vxor.u32 %v504, 2147483648
    %v1025 = vxor.u32 %v545, 2147483648
    %v1026 = vxor.u32 %v547, 2147483648
    %v1027 = vmul.f32 %v1019, 1.442695
    %v1028 = vpow.pop %v1027
    %v1029 = vmul.f32 %v1020, 1.442695
    %v1030 = vpow.pop %v1029
    %v1031 = vmul.f32 %v1021, 1.442695
    %v1032 = vpow.pop %v1031
    %v1033 = vmul.f32 %v1022, 1.442695
    %v1034 = vpow.pop %v1033
    %v1035 = vmul.f32 %v1023, 1.442695
    %v1036 = vpow.pop %v1035
    %v1037 = vmul.f32 %v1024, 1.442695
    %v1038 = vpow.pop %v1037
    %v1039 = vmul.f32 %v1025, 1.442695
    %v1040 = vpow.pop %v1039
    %v1041 = vmul.f32 %v1026, 1.442695
    %v1042 = vpow.pop %v1041
    %v1043 = vadd.f32 %v1028, 1.0
    %v1044 = vadd.f32 %v1030, 1.0
    %v1045 = vadd.f32 %v1032, 1.0
    %v1046 = vadd.f32 %v1034, 1.0
    %v1047 = vadd.f32 %v1036, 1.0
    %v1048 = vadd.f32 %v1038, 1.0
    %v1049 = vadd.f32 %v1040, 1.0
    %v1050 = vadd.f32 %v1042, 1.0
    %v1051 = vrcp.pop %v1043
    %v1052 = vmul.f32 1.0, %v1051
    %v1053 = vrcp.pop %v1044
    %v1054 = vmul.f32 1.0, %v1053
    %v1055 = vrcp.pop %v1045
    %v1056 = vmul.f32 1.0, %v1055
    %v1057 = vrcp.pop %v1046
    %v1058 = vmul.f32 1.0, %v1057
    %v1059 = vrcp.pop %v1047
    %v1060 = vmul.f32 1.0, %v1059
    %v1061 = vrcp.pop %v1048
    %v1062 = vmul.f32 1.0, %v1061
    %v1063 = vrcp.pop %v1049
    %v1064 = vmul.f32 1.0, %v1063
    %v1065 = vrcp.pop %v1050
    %v1066 = vmul.f32 1.0, %v1065
    %v1067 = vmul.f32 %v498, %v1052
    %v1068 = vmul.f32 %v500, %v1054
    %v1069 = vmul.f32 %v541, %v1056
    %v1070 = vmul.f32 %v543, %v1058
    %v1071 = vmul.f32 %v502, %v1060
    %v1072 = vmul.f32 %v504, %v1062
    %v1073 = vmul.f32 %v545, %v1064
    %v1074 = vmul.f32 %v547, %v1066
    %v1075 = vmul.f32 %v1067, %v968
    %v1076 = vmul.f32 %v1068, %v970
    %v1077 = vmul.f32 %v1069, %v1011
    %v1078 = vmul.f32 %v1070, %v1013
    %v1079 = vmul.f32 %v1071, %v972
    %v1080 = vmul.f32 %v1072, %v974
    %v1081 = vmul.f32 %v1073, %v1015
    %v1082 = vmul.f32 %v1074, %v1017
    %v1083 = vld [vmem:[#allocation8] sm:$0xff]
    %v1084 = vld [vmem:[#allocation8 + $0x8] sm:$0xff]
    %v1085 = vld [vmem:[#allocation8 + $0x10] sm:$0xff]
    %v1086 = vld [vmem:[#allocation8 + $0x18] sm:$0xff]
    %v1087 = vpack.c.bf16 %v1079, %v1075
    %v1088 = vpack.c.bf16 %v1080, %v1076
    %v1089 = vpack.c.bf16 %v1081, %v1077
    %v1090 = vpack.c.bf16 %v1082, %v1078
    %v1091 = vld [vmem:[#allocation7] sm:$0xff]
    %v1092 = vld [vmem:[#allocation7 + $0x8] sm:$0xff]
    %v1093 = vld [vmem:[#allocation7 + $0x10] sm:$0xff]
    %v1094 = vld [vmem:[#allocation7 + $0x18] sm:$0xff]
    %v1095 = vld [vmem:[#allocation7 + $0x20] sm:$0xff]
    %v1096 = vld [vmem:[#allocation7 + $0x28] sm:$0xff]
    %v1097 = vld [vmem:[#allocation7 + $0x30] sm:$0xff]
    %v1098 = vld [vmem:[#allocation7 + $0x38] sm:$0xff]
    %v1099 = vld [vmem:[#allocation7 + $0x40] sm:$0xff]
    %v1100 = vld [vmem:[#allocation7 + $0x48] sm:$0xff]
    %v1101 = vld [vmem:[#allocation7 + $0x50] sm:$0xff]
    %v1102 = vld [vmem:[#allocation7 + $0x58] sm:$0xff]
    %v1103 = vld [vmem:[#allocation7 + $0x60] sm:$0xff]
    %v1104 = vld [vmem:[#allocation7 + $0x68] sm:$0xff]
    %v1105 = vld [vmem:[#allocation7 + $0x70] sm:$0xff]
    %v1106 = vld [vmem:[#allocation7 + $0x78] sm:$0xff]
    %v1107 = vld [vmem:[#allocation7 + $0x80] sm:$0xff]
    %v1108 = vld [vmem:[#allocation7 + $0x88] sm:$0xff]
    %v1109 = vld [vmem:[#allocation7 + $0x90] sm:$0xff]
    %v1110 = vld [vmem:[#allocation7 + $0x98] sm:$0xff]
    %v1111 = vld [vmem:[#allocation7 + $0xa0] sm:$0xff]
    %v1112 = vld [vmem:[#allocation7 + $0xa8] sm:$0xff]
    %v1113 = vld [vmem:[#allocation7 + $0xb0] sm:$0xff]
    %v1114 = vld [vmem:[#allocation7 + $0xb8] sm:$0xff]
    %v1115 = vld [vmem:[#allocation7 + $0xc0] sm:$0xff]
    %v1116 = vld [vmem:[#allocation7 + $0xc8] sm:$0xff]
    %v1117 = vld [vmem:[#allocation7 + $0xd0] sm:$0xff]
    %v1118 = vld [vmem:[#allocation7 + $0xd8] sm:$0xff]
    %v1119 = vld [vmem:[#allocation7 + $0xe0] sm:$0xff]
    %v1120 = vld [vmem:[#allocation7 + $0xe8] sm:$0xff]
    %v1121 = vld [vmem:[#allocation7 + $0xf0] sm:$0xff]
    %v1122 = vld [vmem:[#allocation7 + $0xf8] sm:$0xff]
    %v1123 = vld [vmem:[#allocation7 + $0x100] sm:$0xff]
    %v1124 = vld [vmem:[#allocation7 + $0x108] sm:$0xff]
    %v1125 = vld [vmem:[#allocation7 + $0x110] sm:$0xff]
    %v1126 = vld [vmem:[#allocation7 + $0x118] sm:$0xff]
    %v1127 = vld [vmem:[#allocation7 + $0x120] sm:$0xff]
    %v1128 = vld [vmem:[#allocation7 + $0x128] sm:$0xff]
    %v1129 = vld [vmem:[#allocation7 + $0x130] sm:$0xff]
    %v1130 = vld [vmem:[#allocation7 + $0x138] sm:$0xff]
    %v1131 = vld [vmem:[#allocation7 + $0x140] sm:$0xff]
    %v1132 = vld [vmem:[#allocation7 + $0x148] sm:$0xff]
    %v1133 = vld [vmem:[#allocation7 + $0x150] sm:$0xff]
    %v1134 = vld [vmem:[#allocation7 + $0x158] sm:$0xff]
    %v1135 = vld [vmem:[#allocation7 + $0x160] sm:$0xff]
    %v1136 = vld [vmem:[#allocation7 + $0x168] sm:$0xff]
    %v1137 = vld [vmem:[#allocation7 + $0x170] sm:$0xff]
    %v1138 = vld [vmem:[#allocation7 + $0x178] sm:$0xff]
    %v1139 = vld [vmem:[#allocation7 + $0x180] sm:$0xff]
    %v1140 = vld [vmem:[#allocation7 + $0x188] sm:$0xff]
    %v1141 = vld [vmem:[#allocation7 + $0x190] sm:$0xff]
    %v1142 = vld [vmem:[#allocation7 + $0x198] sm:$0xff]
    %v1143 = vld [vmem:[#allocation7 + $0x1a0] sm:$0xff]
    %v1144 = vld [vmem:[#allocation7 + $0x1a8] sm:$0xff]
    %v1145 = vld [vmem:[#allocation7 + $0x1b0] sm:$0xff]
    %v1146 = vld [vmem:[#allocation7 + $0x1b8] sm:$0xff]
    %v1147 = vld [vmem:[#allocation7 + $0x1c0] sm:$0xff]
    %v1148 = vld [vmem:[#allocation7 + $0x1c8] sm:$0xff]
    %v1149 = vld [vmem:[#allocation7 + $0x1d0] sm:$0xff]
    %v1150 = vld [vmem:[#allocation7 + $0x1d8] sm:$0xff]
    %v1151 = vld [vmem:[#allocation7 + $0x1e0] sm:$0xff]
    %v1152 = vld [vmem:[#allocation7 + $0x1e8] sm:$0xff]
    %v1153 = vld [vmem:[#allocation7 + $0x1f0] sm:$0xff]
    %v1154 = vld [vmem:[#allocation7 + $0x1f8] sm:$0xff]
    %v1219 = vunpack.c.l.b16 %v1091
    %v1220 = vunpack.c.h.b16 %v1091
    %v1221 = vunpack.c.l.b16 %v1092
    %v1222 = vunpack.c.h.b16 %v1092
    %v1223 = vunpack.c.l.b16 %v1093
    %v1224 = vunpack.c.h.b16 %v1093
    %v1225 = vunpack.c.l.b16 %v1094
    %v1226 = vunpack.c.h.b16 %v1094
    %v1227 = vunpack.c.l.b16 %v1095
    %v1228 = vunpack.c.h.b16 %v1095
    %v1229 = vunpack.c.l.b16 %v1096
    %v1230 = vunpack.c.h.b16 %v1096
    %v1231 = vunpack.c.l.b16 %v1097
    %v1232 = vunpack.c.h.b16 %v1097
    %v1233 = vunpack.c.l.b16 %v1098
    %v1234 = vunpack.c.h.b16 %v1098
    %v1235 = vunpack.c.l.b16 %v1099
    %v1236 = vunpack.c.h.b16 %v1099
    %v1237 = vunpack.c.l.b16 %v1100
    %v1238 = vunpack.c.h.b16 %v1100
    %v1239 = vunpack.c.l.b16 %v1101
    %v1240 = vunpack.c.h.b16 %v1101
    %v1241 = vunpack.c.l.b16 %v1102
    %v1242 = vunpack.c.h.b16 %v1102
    %v1243 = vunpack.c.l.b16 %v1103
    %v1244 = vunpack.c.h.b16 %v1103
    %v1245 = vunpack.c.l.b16 %v1104
    %v1246 = vunpack.c.h.b16 %v1104
    %v1247 = vunpack.c.l.b16 %v1105
    %v1248 = vunpack.c.h.b16 %v1105
    %v1249 = vunpack.c.l.b16 %v1106
    %v1250 = vunpack.c.h.b16 %v1106
    %v1251 = vunpack.c.l.b16 %v1107
    %v1252 = vunpack.c.h.b16 %v1107
    %v1253 = vunpack.c.l.b16 %v1108
    %v1254 = vunpack.c.h.b16 %v1108
    %v1255 = vunpack.c.l.b16 %v1109
    %v1256 = vunpack.c.h.b16 %v1109
    %v1257 = vunpack.c.l.b16 %v1110
    %v1258 = vunpack.c.h.b16 %v1110
    %v1259 = vunpack.c.l.b16 %v1111
    %v1260 = vunpack.c.h.b16 %v1111
    %v1261 = vunpack.c.l.b16 %v1112
    %v1262 = vunpack.c.h.b16 %v1112
    %v1263 = vunpack.c.l.b16 %v1113
    %v1264 = vunpack.c.h.b16 %v1113
    %v1265 = vunpack.c.l.b16 %v1114
    %v1266 = vunpack.c.h.b16 %v1114
    %v1267 = vunpack.c.l.b16 %v1115
    %v1268 = vunpack.c.h.b16 %v1115
    %v1269 = vunpack.c.l.b16 %v1116
    %v1270 = vunpack.c.h.b16 %v1116
    %v1271 = vunpack.c.l.b16 %v1117
    %v1272 = vunpack.c.h.b16 %v1117
    %v1273 = vunpack.c.l.b16 %v1118
    %v1274 = vunpack.c.h.b16 %v1118
    %v1275 = vunpack.c.l.b16 %v1119
    %v1276 = vunpack.c.h.b16 %v1119
    %v1277 = vunpack.c.l.b16 %v1120
    %v1278 = vunpack.c.h.b16 %v1120
    %v1279 = vunpack.c.l.b16 %v1121
    %v1280 = vunpack.c.h.b16 %v1121
    %v1281 = vunpack.c.l.b16 %v1122
    %v1282 = vunpack.c.h.b16 %v1122
    %v1283 = vunpack.c.l.b16 %v1123
    %v1284 = vunpack.c.h.b16 %v1123
    %v1285 = vunpack.c.l.b16 %v1124
    %v1286 = vunpack.c.h.b16 %v1124
    %v1287 = vunpack.c.l.b16 %v1125
    %v1288 = vunpack.c.h.b16 %v1125
    %v1289 = vunpack.c.l.b16 %v1126
    %v1290 = vunpack.c.h.b16 %v1126
    %v1291 = vunpack.c.l.b16 %v1127
    %v1292 = vunpack.c.h.b16 %v1127
    %v1293 = vunpack.c.l.b16 %v1128
    %v1294 = vunpack.c.h.b16 %v1128
    %v1295 = vunpack.c.l.b16 %v1129
    %v1296 = vunpack.c.h.b16 %v1129
    %v1297 = vunpack.c.l.b16 %v1130
    %v1298 = vunpack.c.h.b16 %v1130
    %v1299 = vunpack.c.l.b16 %v1131
    %v1300 = vunpack.c.h.b16 %v1131
    %v1301 = vunpack.c.l.b16 %v1132
    %v1302 = vunpack.c.h.b16 %v1132
    %v1303 = vunpack.c.l.b16 %v1133
    %v1304 = vunpack.c.h.b16 %v1133
    %v1305 = vunpack.c.l.b16 %v1134
    %v1306 = vunpack.c.h.b16 %v1134
    %v1307 = vunpack.c.l.b16 %v1135
    %v1308 = vunpack.c.h.b16 %v1135
    %v1309 = vunpack.c.l.b16 %v1136
    %v1310 = vunpack.c.h.b16 %v1136
    %v1311 = vunpack.c.l.b16 %v1137
    %v1312 = vunpack.c.h.b16 %v1137
    %v1313 = vunpack.c.l.b16 %v1138
    %v1314 = vunpack.c.h.b16 %v1138
    %v1315 = vunpack.c.l.b16 %v1139
    %v1316 = vunpack.c.h.b16 %v1139
    %v1317 = vunpack.c.l.b16 %v1140
    %v1318 = vunpack.c.h.b16 %v1140
    %v1319 = vunpack.c.l.b16 %v1141
    %v1320 = vunpack.c.h.b16 %v1141
    %v1321 = vunpack.c.l.b16 %v1142
    %v1322 = vunpack.c.h.b16 %v1142
    %v1323 = vunpack.c.l.b16 %v1143
    %v1324 = vunpack.c.h.b16 %v1143
    %v1325 = vunpack.c.l.b16 %v1144
    %v1326 = vunpack.c.h.b16 %v1144
    %v1327 = vunpack.c.l.b16 %v1145
    %v1328 = vunpack.c.h.b16 %v1145
    %v1329 = vunpack.c.l.b16 %v1146
    %v1330 = vunpack.c.h.b16 %v1146
    %v1331 = vunpack.c.l.b16 %v1147
    %v1332 = vunpack.c.h.b16 %v1147
    %v1333 = vunpack.c.l.b16 %v1148
    %v1334 = vunpack.c.h.b16 %v1148
    %v1335 = vunpack.c.l.b16 %v1149
    %v1336 = vunpack.c.h.b16 %v1149
    %v1337 = vunpack.c.l.b16 %v1150
    %v1338 = vunpack.c.h.b16 %v1150
    %v1339 = vunpack.c.l.b16 %v1151
    %v1340 = vunpack.c.h.b16 %v1151
    %v1341 = vunpack.c.l.b16 %v1152
    %v1342 = vunpack.c.h.b16 %v1152
    %v1343 = vunpack.c.l.b16 %v1153
    %v1344 = vunpack.c.h.b16 %v1153
    %v1345 = vunpack.c.l.b16 %v1154
    %v1346 = vunpack.c.h.b16 %v1154
    %v1347 = vpack.c.b16 %v1221, %v1219
    %v1348 = vpack.c.b16 %v1222, %v1220
    %v1349 = vpack.c.b16 %v1225, %v1223
    %v1350 = vpack.c.b16 %v1226, %v1224
    %v1351 = vpack.c.b16 %v1229, %v1227
    %v1352 = vpack.c.b16 %v1230, %v1228
    %v1353 = vpack.c.b16 %v1233, %v1231
    %v1354 = vpack.c.b16 %v1234, %v1232
    %v1355 = vpack.c.b16 %v1237, %v1235
    %v1356 = vpack.c.b16 %v1238, %v1236
    %v1357 = vpack.c.b16 %v1241, %v1239
    %v1358 = vpack.c.b16 %v1242, %v1240
    %v1359 = vpack.c.b16 %v1245, %v1243
    %v1360 = vpack.c.b16 %v1246, %v1244
    %v1361 = vpack.c.b16 %v1249, %v1247
    %v1362 = vpack.c.b16 %v1250, %v1248
    %v1363 = vpack.c.b16 %v1253, %v1251
    %v1364 = vpack.c.b16 %v1254, %v1252
    %v1365 = vpack.c.b16 %v1257, %v1255
    %v1366 = vpack.c.b16 %v1258, %v1256
    %v1367 = vpack.c.b16 %v1261, %v1259
    %v1368 = vpack.c.b16 %v1262, %v1260
    %v1369 = vpack.c.b16 %v1265, %v1263
    %v1370 = vpack.c.b16 %v1266, %v1264
    %v1371 = vpack.c.b16 %v1269, %v1267
    %v1372 = vpack.c.b16 %v1270, %v1268
    %v1373 = vpack.c.b16 %v1273, %v1271
    %v1374 = vpack.c.b16 %v1274, %v1272
    %v1375 = vpack.c.b16 %v1277, %v1275
    %v1376 = vpack.c.b16 %v1278, %v1276
    %v1377 = vpack.c.b16 %v1281, %v1279
    %v1378 = vpack.c.b16 %v1282, %v1280
    %v1379 = vpack.c.b16 %v1285, %v1283
    %v1380 = vpack.c.b16 %v1286, %v1284
    %v1381 = vpack.c.b16 %v1289, %v1287
    %v1382 = vpack.c.b16 %v1290, %v1288
    %v1383 = vpack.c.b16 %v1293, %v1291
    %v1384 = vpack.c.b16 %v1294, %v1292
    %v1385 = vpack.c.b16 %v1297, %v1295
    %v1386 = vpack.c.b16 %v1298, %v1296
    %v1387 = vpack.c.b16 %v1301, %v1299
    %v1388 = vpack.c.b16 %v1302, %v1300
    %v1389 = vpack.c.b16 %v1305, %v1303
    %v1390 = vpack.c.b16 %v1306, %v1304
    %v1391 = vpack.c.b16 %v1309, %v1307
    %v1392 = vpack.c.b16 %v1310, %v1308
    %v1393 = vpack.c.b16 %v1313, %v1311
    %v1394 = vpack.c.b16 %v1314, %v1312
    %v1395 = vpack.c.b16 %v1317, %v1315
    %v1396 = vpack.c.b16 %v1318, %v1316
    %v1397 = vpack.c.b16 %v1321, %v1319
    %v1398 = vpack.c.b16 %v1322, %v1320
    %v1399 = vpack.c.b16 %v1325, %v1323
    %v1400 = vpack.c.b16 %v1326, %v1324
    %v1401 = vpack.c.b16 %v1329, %v1327
    %v1402 = vpack.c.b16 %v1330, %v1328
    %v1403 = vpack.c.b16 %v1333, %v1331
    %v1404 = vpack.c.b16 %v1334, %v1332
    %v1405 = vpack.c.b16 %v1337, %v1335
    %v1406 = vpack.c.b16 %v1338, %v1336
    %v1407 = vpack.c.b16 %v1341, %v1339
    %v1408 = vpack.c.b16 %v1342, %v1340
    %v1409 = vpack.c.b16 %v1345, %v1343
    %v1410 = vpack.c.b16 %v1346, %v1344
    %1475 = vmatprep.subr.bf16.mxu0 %v1348
    %1476 = vmatpush1.bf16.msra.mxu0 %v1347
    %1477 = vmatprep.subr.bf16.mxu0 %v1350
    %1478 = vmatpush1.bf16.msra.mxu0 %v1349
    %1479 = vmatprep.subr.bf16.mxu0 %v1352
    %1480 = vmatpush1.bf16.msra.mxu0 %v1351
    %1481 = vmatprep.subr.bf16.mxu0 %v1354
    %1482 = vmatpush1.bf16.msra.mxu0 %v1353
    %1483 = vmatprep.subr.bf16.mxu0 %v1356
    %1484 = vmatpush1.bf16.msra.mxu0 %v1355
    %1485 = vmatprep.subr.bf16.mxu0 %v1358
    %1486 = vmatpush1.bf16.msra.mxu0 %v1357
    %1487 = vmatprep.subr.bf16.mxu0 %v1360
    %1488 = vmatpush1.bf16.msra.mxu0 %v1359
    %1489 = vmatprep.subr.bf16.mxu0 %v1362
    %1490 = vmatpush1.bf16.msra.mxu0 %v1361
    %1491 = vmatprep.subr.bf16.mxu0 %v1364
    %1492 = vmatpush1.bf16.msra.mxu0 %v1363
    %1493 = vmatprep.subr.bf16.mxu0 %v1366
    %1494 = vmatpush1.bf16.msra.mxu0 %v1365
    %1495 = vmatprep.subr.bf16.mxu0 %v1368
    %1496 = vmatpush1.bf16.msra.mxu0 %v1367
    %1497 = vmatprep.subr.bf16.mxu0 %v1370
    %1498 = vmatpush1.bf16.msra.mxu0 %v1369
    %1499 = vmatprep.subr.bf16.mxu0 %v1372
    %1500 = vmatpush1.bf16.msra.mxu0 %v1371
    %1501 = vmatprep.subr.bf16.mxu0 %v1374
    %1502 = vmatpush1.bf16.msra.mxu0 %v1373
    %1503 = vmatprep.subr.bf16.mxu0 %v1376
    %1504 = vmatpush1.bf16.msra.mxu0 %v1375
    %1505 = vmatprep.subr.bf16.mxu0 %v1378
    %1506 = vmatpush1.bf16.msra.mxu0 %v1377
    %1507 = vmatprep.mubr.bf16.mxu0 %v1088
    %1508 = vmatmul.mubr.bf16.gmra.mrb[0].mxu0 %v1087
    %v1509 = vpop.f32.mrb[0].mxu0
    %v1510 = vadd.f32 0.0, %v1509
    %v1511 = vpop.f32.mrb[0].mxu0
    %v1512 = vadd.f32 0.0, %v1511
    %v1513 = vpop.f32.mrb[0].mxu0
    %v1514 = vadd.f32 0.0, %v1513
    %v1515 = vpop.f32.mrb[0].mxu0
    %v1516 = vadd.f32 0.0, %v1515
    %1517 = vdwg.mxu0
    %1518 = vmatprep.subr.bf16.mxu0 %v1380
    %1519 = vmatpush1.bf16.msra.mxu0 %v1379
    %1520 = vmatprep.subr.bf16.mxu0 %v1382
    %1521 = vmatpush1.bf16.msra.mxu0 %v1381
    %1522 = vmatprep.subr.bf16.mxu0 %v1384
    %1523 = vmatpush1.bf16.msra.mxu0 %v1383
    %1524 = vmatprep.subr.bf16.mxu0 %v1386
    %1525 = vmatpush1.bf16.msra.mxu0 %v1385
    %1526 = vmatprep.subr.bf16.mxu0 %v1388
    %1527 = vmatpush1.bf16.msra.mxu0 %v1387
    %1528 = vmatprep.subr.bf16.mxu0 %v1390
    %1529 = vmatpush1.bf16.msra.mxu0 %v1389
    %1530 = vmatprep.subr.bf16.mxu0 %v1392
    %1531 = vmatpush1.bf16.msra.mxu0 %v1391
    %1532 = vmatprep.subr.bf16.mxu0 %v1394
    %1533 = vmatpush1.bf16.msra.mxu0 %v1393
    %1534 = vmatprep.subr.bf16.mxu0 %v1396
    %1535 = vmatpush1.bf16.msra.mxu0 %v1395
    %1536 = vmatprep.subr.bf16.mxu0 %v1398
    %1537 = vmatpush1.bf16.msra.mxu0 %v1397
    %1538 = vmatprep.subr.bf16.mxu0 %v1400
    %1539 = vmatpush1.bf16.msra.mxu0 %v1399
    %1540 = vmatprep.subr.bf16.mxu0 %v1402
    %1541 = vmatpush1.bf16.msra.mxu0 %v1401
    %1542 = vmatprep.subr.bf16.mxu0 %v1404
    %1543 = vmatpush1.bf16.msra.mxu0 %v1403
    %1544 = vmatprep.subr.bf16.mxu0 %v1406
    %1545 = vmatpush1.bf16.msra.mxu0 %v1405
    %1546 = vmatprep.subr.bf16.mxu0 %v1408
    %1547 = vmatpush1.bf16.msra.mxu0 %v1407
    %1548 = vmatprep.subr.bf16.mxu0 %v1410
    %1549 = vmatpush1.bf16.msra.mxu0 %v1409
    %1550 = vmatprep.mubr.bf16.mxu0 %v1090
    %1551 = vmatmul.mubr.bf16.gmra.mrb[0].mxu0 %v1089
    %v1552 = vpop.f32.mrb[0].mxu0
    %v1553 = vadd.f32 %v1510, %v1552
    %v1554 = vpop.f32.mrb[0].mxu0
    %v1555 = vadd.f32 %v1512, %v1554
    %v1556 = vpop.f32.mrb[0].mxu0
    %v1557 = vadd.f32 %v1514, %v1556
    %v1558 = vpop.f32.mrb[0].mxu0
    %v1559 = vadd.f32 %v1516, %v1558
    %1560 = vdwg.mxu0
    %v1561 = vadd.f32 %v1083, %v1553
    %v1562 = vadd.f32 %v1084, %v1555
    %v1563 = vadd.f32 %v1085, %v1557
    %v1564 = vadd.f32 %v1086, %v1559
    %1565 = vst [vmem:[#allocation8] sm:$0xff] %v1561
    %1566 = vst [vmem:[#allocation8 + $0x8] sm:$0xff] %v1562
    %1567 = vst [vmem:[#allocation8 + $0x10] sm:$0xff] %v1563
    %1568 = vst [vmem:[#allocation8 + $0x18] sm:$0xff] %v1564
    // Predicated region
    $region34: #{feed_forward.1} parent=1 // pred_check
      _
    $region35: #{feed_forward.1} parent=1 // pred_check_branch
      %1570 = sbr.rel (0) target = $region37
    $region36: #{feed_forward.1} parent=1 // pred_region
      %s1572 = ssub.s32 512, 512
      %1573 = vsyncadd [#allocation4], %s1572
      %s1574 = sshll.u32 [#allocation8], 4
      %s1575 = int_to_ptr.vmem [resolvable:$true] %s1574
      %1580 = dma.vmem_to_hbm [thread:$0]  %s1575, 512, %s4, [#allocation4], 256, 256, 16
    $region37: #{feed_forward.1} parent=1 // pred_fallthru
      _
    // Predicated region
    $region38: #{feed_forward.1} parent=1 // pred_check
      _
    $region39: #{feed_forward.1} parent=1 // pred_check_branch
      %1582 = sbr.rel (0) target = $region41
    $region40: #{feed_forward.1} parent=1 // pred_region
      %1583 = dma.done [#allocation4], 512
    $region41: #{feed_forward.1} parent=1 // pred_fallthru
      _
    %1584 = vsyncpa [#allocation3], 1
    %1585 = vsyncpa [#allocation6], 1
    %1586 = vsyncpa [#allocation4], 1

</llo_original>
